<compile_context>
chip_gen: v7x
topology: tpu7x:2x2x1
jax: 0.10.0
libtpu: 0.0.40
codegen_flags: <defaults>
</compile_context>

<pallas_src>
import math
import numpy as np
import jax
import jax.numpy as jnp
from jax.experimental import pallas as pl
from jax.experimental.pallas import tpu as pltpu

# ---------------- model dims (small, consistent with the module) ----------------
B = 2       # batch
S = 8       # flows / tokens per sample
FEAT = 16   # feature_nums (input features per flow)
DIM = 32    # embedding dim ("dim")


def flow_embedding_kernel(x_ref, w_ref, b_ref, o_ref):
    # x_ref: (M, FEAT)  w_ref: (FEAT, DIM)  b_ref: (1, DIM)  o_ref: (M, DIM)
    o_ref[...] = (
        jnp.dot(x_ref[...], w_ref[...], preferred_element_type=jnp.float32)
        + b_ref[...]
    )


def flow_embeddings(feature_set, w_fd, bias):
    """feature_set: (B, S, FEAT); w_fd: (FEAT, DIM) weight pre-transposed ONCE at init; bias: (DIM,)."""
    Bn, Sn, Fn = feature_set.shape
    Dn = w_fd.shape[1]
    M = Bn * Sn
    x2d = feature_set.reshape(M, Fn)   # flatten tokens on the host (taller M for the MXU)
    b2d = bias.reshape(1, Dn)          # (1, DIM) for a clean in-kernel broadcast add

    cost = pl.CostEstimate(
        flops=2 * M * Fn * Dn,
        bytes_accessed=4 * (M * Fn + Fn * Dn + Dn + M * Dn),
        transcendentals=0,
    )

    out2d = pl.pallas_call(
        flow_embedding_kernel,
        out_shape=jax.ShapeDtypeStruct((M, Dn), jnp.float32),
        # No grid: single kernel invocation, no pipeline machinery, no double-buffering.
        in_specs=[
            pl.BlockSpec(memory_space=pltpu.VMEM),   # x  (all tokens, resident in VMEM)
            pl.BlockSpec(memory_space=pltpu.VMEM),   # W  (already (FEAT, DIM))
            pl.BlockSpec(memory_space=pltpu.VMEM),   # bias
        ],
        out_specs=pl.BlockSpec(memory_space=pltpu.VMEM),
        cost_estimate=cost,
    )(x2d, w_fd, b2d)
    return out2d.reshape(Bn, Sn, Dn)


# ---------------- pure-JAX reference (same math, torch nn.Linear layout) ----------------
def flow_embeddings_ref(feature_set, weight, bias):
    return feature_set @ weight.T + bias


if __name__ == "__main__":
    key = jax.random.PRNGKey(0)
    k_x, k_w, k_b = jax.random.split(key, 3)

    x = jax.random.normal(k_x, (B, S, FEAT), dtype=jnp.float32)

    # nn.Linear-style init (uniform in [-1/sqrt(fan_in), 1/sqrt(fan_in)]), deterministic.
    bound = 1.0 / math.sqrt(FEAT)
    weight = jax.random.uniform(k_w, (DIM, FEAT), jnp.float32, minval=-bound, maxval=bound)  # torch layout
    bias = jax.random.uniform(k_b, (DIM,), jnp.float32, minval=-bound, maxval=bound)

    # One-time parameter preparation (NOT in the per-forward path): store W as (FEAT, DIM).
    w_fd = jnp.asarray(weight.T)

    out = jax.block_until_ready(flow_embeddings(x, w_fd, bias))
    ref = jax.block_until_ready(flow_embeddings_ref(x, weight, bias))
    np.testing.assert_allclose(np.asarray(out), np.asarray(ref), rtol=1e-5, atol=1e-5)
    print("KERNEL_OK")
</pallas_src>

<mosaic_0001>
module attributes {stable_mosaic.version = 11 : i64} {
  func.func @flow_embedding_kernel(%arg0: memref<16x16xf32, #tpu.memory_space<vmem>>, %arg1: memref<16x32xf32, #tpu.memory_space<vmem>>, %arg2: memref<1x32xf32, #tpu.memory_space<vmem>>, %arg3: memref<16x32xf32, #tpu.memory_space<vmem>>) attributes {dimension_semantics = [], scalar_prefetch = 0 : i64, scratch_operands = 0 : i64, tpu.core_type = #tpu.core_type<tc>} {
    %c0 = arith.constant 0 : index
    %c0_0 = arith.constant 0 : index
    %0 = vector.load %arg0[%c0, %c0_0] : memref<16x16xf32, #tpu.memory_space<vmem>>, vector<16x16xf32>
    %c0_1 = arith.constant 0 : index
    %c0_2 = arith.constant 0 : index
    %1 = vector.load %arg1[%c0_1, %c0_2] : memref<16x32xf32, #tpu.memory_space<vmem>>, vector<16x32xf32>
    %cst = arith.constant dense<0.000000e+00> : vector<16x32xf32>
    %2 = tpu.matmul %0, %1, %cst {dimension_numbers = #tpu.dot_dimension_numbers<[1], [0], [0], [1], [0, 0, 1, 1], [], []>} : vector<16x16xf32>, vector<16x32xf32>, vector<16x32xf32> -> vector<16x32xf32>
    %c0_3 = arith.constant 0 : index
    %c0_4 = arith.constant 0 : index
    %3 = vector.load %arg2[%c0_3, %c0_4] : memref<1x32xf32, #tpu.memory_space<vmem>>, vector<1x32xf32>
    %4 = vector.broadcast %3 : vector<1x32xf32> to vector<16x32xf32>
    %5 = arith.addf %2, %4 : vector<16x32xf32>
    %c0_5 = arith.constant 0 : index
    %c0_6 = arith.constant 0 : index
    %6 = vector.load %arg3[%c0_5, %c0_6] : memref<16x32xf32, #tpu.memory_space<vmem>>, vector<16x32xf32>
    tpu.vector_store %arg3[%c0_5, %c0_6], %5 {strides = array<i32>} : memref<16x32xf32, #tpu.memory_space<vmem>>, vector<16x32xf32>,
    return
  }
}

</mosaic_0001>

<llo_original>
// kernel: tpu_custom_call.1
$region0: #{tpu_custom_call.1}
  #allocation0 [shape = 'u32[]', space=smem, size = 0x4, offset = 0x4, fixed_abs, tag = 'smem constant byte address 0x4 - core index']
  #allocation1 [shape = 'u32[144,128]{1,0:T(1,128)}', space=vmem, size = 0x12000, scoped, tag = 'internal scratch']
  %s0 = inlined_call_operand.hbm [shape: f32[16,16], index: 0, kind: input, shape index: {}]
  %s1 = inlined_call_operand.hbm [shape: f32[16,32], index: 1, kind: input, shape index: {}]
  %s2 = inlined_call_operand.vmem [shape: f32[1,32], index: 2, kind: input, shape index: {}]
  %s3 = inlined_call_operand.hbm [shape: f32[16,32], index: 3, kind: output, shape index: {}]
  %s4 = sld [smem:[#allocation0]]
  $region30: #{tpu_custom_call.1} parent=0
    _
  %s6 = ssub.s32 1, %s4
  %s7 = scalar_select 0, %s6, %s4
  $region1: #{tpu_custom_call.1} parent=0
    #allocation2 [shape = 'u8[8192]{0}', space=vmem, size = 0x2000, scoped, tag = 'input window, operand 0, single buffered']
    #allocation3 [shape = 's32[1]{0}', space=sflag, size = 0x4, scoped, tag = 'scoped memory for tpu_custom_call.1']
    #allocation4 [shape = 's32[1]{0}', space=sflag, size = 0x4, scoped, tag = 'scoped memory for tpu_custom_call.1']
    #allocation5 [shape = 'u8[8192]{0}', space=vmem, size = 0x2000, scoped, tag = 'input window, operand 1, single buffered']
    #allocation6 [shape = 's32[1]{0}', space=sflag, size = 0x4, scoped, tag = 'scoped memory for tpu_custom_call.1']
    #allocation7 [shape = 'u8[8192]{0}', space=vmem, size = 0x2000, scoped, tag = 'output window, operand 0, single buffered']
    %8 = vsyncpa [#allocation3], 0
    %9 = vsyncpa [#allocation6], 0
    %10 = vsyncpa [#allocation4], 0
    // Predicated region
    $region2: #{tpu_custom_call.1} parent=1 // pred_check
      _
    $region3: #{tpu_custom_call.1} parent=1 // pred_check_branch
      %12 = sbr.rel (0) target = $region5
    $region4: #{tpu_custom_call.1} parent=1 // pred_region
      %s14 = ssub.s32 256, 256
      %15 = vsyncadd [#allocation3], %s14
      %s16 = sshll.u32 [#allocation2], 4
      %s17 = int_to_ptr.vmem [resolvable:$true] %s16
      %22 = dma.hbm_to_vmem [thread:$0]  %s0, 256, %s17, [#allocation3], 128, 128, 8
    $region5: #{tpu_custom_call.1} parent=1 // pred_fallthru
      _
    // Predicated region
    $region6: #{tpu_custom_call.1} parent=1 // pred_check
      _
    $region7: #{tpu_custom_call.1} parent=1 // pred_check_branch
      %24 = sbr.rel (0) target = $region9
    $region8: #{tpu_custom_call.1} parent=1 // pred_region
      %s26 = ssub.s32 256, 256
      %27 = vsyncadd [#allocation6], %s26
      %s28 = sshll.u32 [#allocation5], 4
      %s29 = int_to_ptr.vmem [resolvable:$true] %s28
      %34 = dma.hbm_to_vmem [thread:$0]  %s1, 256, %s29, [#allocation6], 128, 128, 8
    $region9: #{tpu_custom_call.1} parent=1 // pred_fallthru
      _
    // Predicated region
    $region10: #{tpu_custom_call.1} parent=1 // pred_check
      _
    $region11: #{tpu_custom_call.1} parent=1 // pred_check_branch
      %36 = sbr.rel (0) target = $region13
    $region12: #{tpu_custom_call.1} parent=1 // pred_region
      _
    $region13: #{tpu_custom_call.1} parent=1 // pred_fallthru
      _
    // Predicated region
    $region14: #{tpu_custom_call.1} parent=1 // pred_check
      _
    $region15: #{tpu_custom_call.1} parent=1 // pred_check_branch
      %38 = sbr.rel (0) target = $region17
    $region16: #{tpu_custom_call.1} parent=1 // pred_region
      %39 = dma.done [#allocation3], 256
    $region17: #{tpu_custom_call.1} parent=1 // pred_fallthru
      _
    // Predicated region
    $region18: #{tpu_custom_call.1} parent=1 // pred_check
      _
    $region19: #{tpu_custom_call.1} parent=1 // pred_check_branch
      %41 = sbr.rel (0) target = $region21
    $region20: #{tpu_custom_call.1} parent=1 // pred_region
      %42 = dma.done [#allocation6], 256
    $region21: #{tpu_custom_call.1} parent=1 // pred_fallthru
      _
    %v43 = vld [vmem:[#allocation2] sm:$0xff]
    %v44 = vld [vmem:[#allocation2 + $0x8] sm:$0xff]
    %v45 = vld [vmem:[#allocation5] sm:$0xff]
    %v46 = vld [vmem:[#allocation5 + $0x8] sm:$0xff]
    %v47 = vld [vmem:[%s2] sm:$0x1]
    %v49 = vlaneseq
    %v50 = vshrl.u32 %v49, 7
    %v51 = vsub.s32 0, %v50
    %v52 = vrot.slane %v47, %v51
    %vm54 = vcmask 130048
    %v56 = vsel %vm54, %v43, 0
    %v59 = vsel %vm54, %v44, 0
    %61 = vmatprep.subr.mxu0 0.0
    %62 = vmatpush1.msra.mxu0 %v45
    %63 = vmatprep.subr.mxu0 0.0
    %64 = vmatpush1.msra.mxu0 %v46
    %65 = vmatprep.subr.mxu0 0.0
    %66 = vmatpush1.msra.mxu0 0.0
    %67 = vmatprep.subr.mxu0 0.0
    %68 = vmatpush1.msra.mxu0 0.0
    %69 = vmatprep.subr.mxu0 0.0
    %70 = vmatpush1.msra.mxu0 0.0
    %71 = vmatprep.subr.mxu0 0.0
    %72 = vmatpush1.msra.mxu0 0.0
    %73 = vmatprep.subr.mxu0 0.0
    %74 = vmatpush1.msra.mxu0 0.0
    %75 = vmatprep.subr.mxu0 0.0
    %76 = vmatpush1.msra.mxu0 0.0
    %77 = vmatprep.subr.mxu0 0.0
    %78 = vmatpush1.msra.mxu0 0.0
    %79 = vmatprep.subr.mxu0 0.0
    %80 = vmatpush1.msra.mxu0 0.0
    %81 = vmatprep.subr.mxu0 0.0
    %82 = vmatpush1.msra.mxu0 0.0
    %83 = vmatprep.subr.mxu0 0.0
    %84 = vmatpush1.msra.mxu0 0.0
    %85 = vmatprep.subr.mxu0 0.0
    %86 = vmatpush1.msra.mxu0 0.0
    %87 = vmatprep.subr.mxu0 0.0
    %88 = vmatpush1.msra.mxu0 0.0
    %89 = vmatprep.subr.mxu0 0.0
    %90 = vmatpush1.msra.mxu0 0.0
    %91 = vmatprep.subr.mxu0 0.0
    %92 = vmatpush1.msra.mxu0 0.0
    %93 = vmatprep.subr.mxu0 0.0
    %94 = vmatpush1.msra.mxu0 0.0
    %95 = vmatprep.subr.mxu0 0.0
    %96 = vmatpush1.msra.mxu0 0.0
    %97 = vmatprep.subr.mxu0 0.0
    %98 = vmatpush1.msra.mxu0 0.0
    %99 = vmatprep.subr.mxu0 0.0
    %100 = vmatpush1.msra.mxu0 0.0
    %101 = vmatprep.subr.mxu0 0.0
    %102 = vmatpush1.msra.mxu0 0.0
    %103 = vmatprep.subr.mxu0 0.0
    %104 = vmatpush1.msra.mxu0 0.0
    %105 = vmatprep.subr.mxu0 0.0
    %106 = vmatpush1.msra.mxu0 0.0
    %107 = vmatprep.subr.mxu0 0.0
    %108 = vmatpush1.msra.mxu0 0.0
    %109 = vmatprep.subr.mxu0 0.0
    %110 = vmatpush1.msra.mxu0 0.0
    %111 = vmatprep.subr.mxu0 0.0
    %112 = vmatpush1.msra.mxu0 0.0
    %113 = vmatprep.subr.mxu0 0.0
    %114 = vmatpush1.msra.mxu0 0.0
    %115 = vmatprep.subr.mxu0 0.0
    %116 = vmatpush1.msra.mxu0 0.0
    %117 = vmatprep.subr.mxu0 0.0
    %118 = vmatpush1.msra.mxu0 0.0
    %119 = vmatprep.subr.mxu0 0.0
    %120 = vmatpush1.msra.mxu0 0.0
    %121 = vmatprep.subr.mxu0 0.0
    %122 = vmatpush1.msra.mxu0 0.0
    %123 = vmatprep.subr.mxu0 0.0
    %124 = vmatpush1.msra.mxu0 0.0
    %125 = vmatprep.mubr.f32.mxu0 0.0
    %126 = vmatmul.mubr.f32.gmra.mrb[0].mxu0 %v56
    %v127 = vpop.f32.mrb[0].mxu0
    %v128 = vadd.f32 %v52, %v127
    %v129 = vpop.f32.mrb[0].mxu0
    %130 = vmatprep.mubr.f32.mxu0 0.0
    %131 = vmatmul.mubr.f32.gmra.mrb[0].mxu0 %v59
    %v132 = vpop.f32.mrb[0].mxu0
    %v133 = vadd.f32 %v52, %v132
    %v134 = vpop.f32.mrb[0].mxu0
    %135 = vdwg.mxu0
    %vm136 = vcmask 261120
    %137 = vst.msk [vmem:[#allocation7] sm:$0xff] %vm136, %v128
    %138 = vst.msk [vmem:[#allocation7 + $0x8] sm:$0xff] %vm136, %v133
    // Predicated region
    $region22: #{tpu_custom_call.1} parent=1 // pred_check
      _
    $region23: #{tpu_custom_call.1} parent=1 // pred_check_branch
      %140 = sbr.rel (0) target = $region25
    $region24: #{tpu_custom_call.1} parent=1 // pred_region
      %s142 = ssub.s32 256, 256
      %143 = vsyncadd [#allocation4], %s142
      %s144 = sshll.u32 [#allocation7], 4
      %s145 = int_to_ptr.vmem [resolvable:$true] %s144
      %150 = dma.vmem_to_hbm [thread:$0]  %s145, 256, %s3, [#allocation4], 128, 128, 8
    $region25: #{tpu_custom_call.1} parent=1 // pred_fallthru
      _
    // Predicated region
    $region26: #{tpu_custom_call.1} parent=1 // pred_check
      _
    $region27: #{tpu_custom_call.1} parent=1 // pred_check_branch
      %152 = sbr.rel (0) target = $region29
    $region28: #{tpu_custom_call.1} parent=1 // pred_region
      %153 = dma.done [#allocation4], 256
    $region29: #{tpu_custom_call.1} parent=1 // pred_fallthru
      _
    %154 = vsyncpa [#allocation3], 1
    %155 = vsyncpa [#allocation6], 1
    %156 = vsyncpa [#allocation4], 1

</llo_original>
